<compile_context>
chip_gen: v5e
topology: v5e:2x2
jax: 0.10.0
libtpu: 0.0.40
codegen_flags: <defaults>
</compile_context>

<pallas_src>
import functools

import jax
import jax.numpy as jnp
import numpy as np
from jax.experimental import pallas as pl
from jax.experimental.pallas import tpu as pltpu

S_DIM = 10
H_DIM = 25
BRANCHES = [1, 2, 3]
LN_EPS = 1e-5

H2P = 64        # padded lane width for h / 2h activations (2*h_dim = 50 -> 64)
SEG = 128       # per-branch lane stride inside the fused f-consumer matmul / bias slab
OUT_W = 128     # lane-dense output width (branches packed into the first sum(branches) cols)


# ----------------------------------------------------------------------------- kernel ----
def dqn_ab_kernel(x_ref, w_a_ref, w_f_ref, w_b_ref, vec_ref, out_ref,
                  *, num_branches, inv_four_h, seg, h2p, sdp, out_w, ln_eps):
    relu = lambda v: jnp.maximum(v, 0.0)
    dot = lambda a, b: jnp.dot(a, b, preferred_element_type=jnp.float32)

    x = x_ref[...]                                                   # [B, sdp] (zero-padded)

    # shared: Linear(s_dim, h) + ReLU            (w_a rows 0:sdp; padded rows/cols are zero)
    f = relu(dot(x, w_a_ref[0:sdp, :]) + vec_ref[0:1, 0:h2p])        # [B, 64]

    # ONE fused matmul: segment 0 -> shared_state first Linear(h, h),
    # segment i+1 -> domains[i] first Linear(h, 2h). 128-lane stride per segment.
    fused = relu(dot(f, w_f_ref[...]) + vec_ref[1:2, :])             # [B, 512]

    t = fused[:, 0:h2p]                                              # [B, 64]
    # shared_state second Linear(h, 2h) + ReLU   (w_a rows sdp:sdp+64)
    s = relu(dot(t, w_a_ref[sdp:sdp + h2p, :]) + vec_ref[2:3, 0:h2p])  # [B, 64] (cols 50: = 0)

    # branch-invariant LayerNorm statistics of the "s" half (hoisted out of the loop)
    sum_s = jnp.sum(s, axis=1, keepdims=True)
    sum_s2 = jnp.sum(s * s, axis=1, keepdims=True)

    # accumulate all branch outputs into one lane-dense [B, out_w] slab (single store)
    o2 = vec_ref[5:6, 0:out_w]                                       # packed output bias
    for i in range(num_branches):                                    # static unroll
        d1 = fused[:, seg * (i + 1): seg * (i + 1) + h2p]            # free 128-aligned slice
        # domains[i] second Linear(2h, 2h) + ReLU
        d2 = relu(dot(d1, w_b_ref[i, 0:h2p, 0:h2p])
                  + vec_ref[3:4, seg * i: seg * i + h2p])

        # LayerNorm over concat([d2, s]) of true width 4h (padded lanes are exact zeros)
        sum_d = jnp.sum(d2, axis=1, keepdims=True)
        sum_d2 = jnp.sum(d2 * d2, axis=1, keepdims=True)
        mu = (sum_d + sum_s) * inv_four_h
        var = jnp.maximum((sum_d2 + sum_s2) * inv_four_h - mu * mu, 0.0)
        inv = jax.lax.rsqrt(var + ln_eps)

        ndc = (d2 - mu) * inv                                        # gamma/beta folded into
        nsc = (s - mu) * inv                                         # the weights below
        # outputs[i]: Linear(4h, 2h) + ReLU  (split into the two 2h halves)
        o1 = relu(dot(ndc, w_b_ref[i, h2p:2 * h2p, 0:h2p])
                  + dot(nsc, w_b_ref[i, 2 * h2p:3 * h2p, 0:h2p])
                  + vec_ref[4:5, seg * i: seg * i + h2p])
        # outputs[i]: Linear(2h, branches[i]) placed at this branch's output columns
        o2 = o2 + dot(o1, w_b_ref[i, 3 * h2p:4 * h2p, :])

    out_ref[...] = o2                                                # single [B, 128] store


# --------------------------------------------------------------------------- parameters ---
def _init_linear(key, fan_in, fan_out):
    """PyTorch nn.Linear default init: U(-1/sqrt(fan_in), 1/sqrt(fan_in))."""
    kw, kb = jax.random.split(key)
    bound = 1.0 / np.sqrt(fan_in)
    w = jax.random.uniform(kw, (fan_in, fan_out), jnp.float32, -bound, bound)
    b = jax.random.uniform(kb, (fan_out,), jnp.float32, -bound, bound)
    return w, b


def init_params(key, s_dim=S_DIM, h_dim=H_DIM, branches=BRANCHES):
    """Natural (unpacked) parameters, weights stored as [in, out]."""
    ks = iter(jax.random.split(key, 4 + 4 * len(branches)))
    p = {}
    p["w1"], p["b1"] = _init_linear(next(ks), s_dim, h_dim)
    p["w2"], p["b2"] = _init_linear(next(ks), h_dim, h_dim)
    p["w3"], p["b3"] = _init_linear(next(ks), h_dim, 2 * h_dim)
    for name in ("wd1", "bd1", "wd2", "bd2", "wo1", "bo1", "wo2", "bo2"):
        p[name] = []
    for br in branches:
        w, b = _init_linear(next(ks), h_dim, 2 * h_dim); p["wd1"].append(w); p["bd1"].append(b)
        w, b = _init_linear(next(ks), 2 * h_dim, 2 * h_dim); p["wd2"].append(w); p["bd2"].append(b)
        w, b = _init_linear(next(ks), 4 * h_dim, 2 * h_dim); p["wo1"].append(w); p["bo1"].append(b)
        w, b = _init_linear(next(ks), 2 * h_dim, br); p["wo2"].append(w); p["bo2"].append(b)
    p["ln_gamma"] = jnp.ones((4 * h_dim,), jnp.float32)   # nn.LayerNorm default
    p["ln_beta"] = jnp.zeros((4 * h_dim,), jnp.float32)
    return p


def pack_params(params, s_dim=S_DIM, h_dim=H_DIM, branches=BRANCHES):
    """One-time host-side packing: fold LayerNorm affine, zero-pad, fuse & stack weights."""
    nb = len(branches)
    h2 = 2 * h_dim
    sdp = int(-(-s_dim // 8) * 8)                       # s_dim padded to sublane multiple (16)
    assert h2 <= H2P <= SEG and sum(branches) <= OUT_W
    nf = SEG * (nb + 1)
    A = lambda a: np.asarray(a, np.float32)

    # w_a: row-stacked [w1 ; w3]  (8-aligned row offsets)
    w_a = np.zeros((sdp + H2P, H2P), np.float32)
    w_a[:s_dim, :h_dim] = A(params["w1"])
    w_a[sdp:sdp + h_dim, :h2] = A(params["w3"])

    # w_f: fused f-consumer weight (segment 0 = w2, segment i+1 = wd1_i)
    w_f = np.zeros((H2P, nf), np.float32)
    w_f[:h_dim, :h_dim] = A(params["w2"])

    gamma = A(params["ln_gamma"]); beta = A(params["ln_beta"])
    gd, gs = gamma[:h2], gamma[h2:]

    # w_b: per-branch row-stacked [wd2 ; wo1_d' ; wo1_s' ; wo2']  -> [nb, 4*H2P, OUT_W]
    w_b = np.zeros((nb, 4 * H2P, OUT_W), np.float32)
    vec = np.zeros((6, nf), np.float32)                 # single bias / vector slab
    vec[0, :h_dim] = A(params["b1"])
    vec[1, :h_dim] = A(params["b2"])
    vec[2, :h2] = A(params["b3"])

    offs = np.concatenate([[0], np.cumsum(branches)]).astype(int)
    for i, br in enumerate(branches):
        w_f[:h_dim, SEG * (i + 1):SEG * (i + 1) + h2] = A(params["wd1"][i])
        vec[1, SEG * (i + 1):SEG * (i + 1) + h2] = A(params["bd1"][i])

        w_b[i, 0:h2, :h2] = A(params["wd2"][i])
        vec[3, SEG * i:SEG * i + h2] = A(params["bd2"][i])

        wo1 = A(params["wo1"][i])                              # [4h, 2h]
        w_b[i, H2P:H2P + h2, :h2] = wo1[:h2] * gd[:, None]     # gamma folded (row scale)
        w_b[i, 2 * H2P:2 * H2P + h2, :h2] = wo1[h2:] * gs[:, None]
        vec[4, SEG * i:SEG * i + h2] = A(params["bo1"][i]) + beta @ wo1   # beta folded

        w_b[i, 3 * H2P:3 * H2P + h2, offs[i]:offs[i] + br] = A(params["wo2"][i])
        vec[5, offs[i]:offs[i] + br] = A(params["bo2"][i])

    return {"w_a": jnp.asarray(w_a), "w_f": jnp.asarray(w_f), "w_b": jnp.asarray(w_b),
            "vec": jnp.asarray(vec), "sdp": sdp}


# ------------------------------------------------------------------------------ wrapper ---
def dqn_ab_forward(packed, x, s_dim=S_DIM, h_dim=H_DIM, branches=BRANCHES, max_block_b=1024):
    # NOTE: for best wall-clock, batch several env states / both online+target nets into one
    # call — total compute is tiny and launch overhead dominates at batch ~O(1).
    if x.ndim == 1:
        x = x.reshape(-1, s_dim)
    x = x.astype(jnp.float32)
    batch = x.shape[0]
    nb = len(branches)
    sdp = packed["sdp"]

    # batch tiling: single block for small batches; parallel grid for training-sized batches
    bb = batch if batch <= max_block_b else max_block_b
    row_pad = (-batch) % bb
    lane_pad = sdp - s_dim
    xp = jnp.pad(x, ((0, row_pad), (0, lane_pad))) if (row_pad or lane_pad) else x
    pb = batch + row_pad
    grid = (pb // bb,)

    kernel = functools.partial(
        dqn_ab_kernel, num_branches=nb, inv_four_h=1.0 / float(4 * h_dim),
        seg=SEG, h2p=H2P, sdp=sdp, out_w=OUT_W, ln_eps=LN_EPS)

    def full_spec(a):
        return pl.BlockSpec(a.shape, lambda i, _nd=a.ndim: (0,) * _nd)

    out = pl.pallas_call(
        kernel,
        out_shape=jax.ShapeDtypeStruct((pb, OUT_W), jnp.float32),
        grid=grid,
        in_specs=[
            pl.BlockSpec((bb, sdp), lambda i: (i, 0)),
            full_spec(packed["w_a"]), full_spec(packed["w_f"]),
            full_spec(packed["w_b"]), full_spec(packed["vec"]),
        ],
        out_specs=pl.BlockSpec((bb, OUT_W), lambda i: (i, 0)),
        compiler_params=pltpu.CompilerParams(dimension_semantics=("parallel",)),
    )(xp, packed["w_a"], packed["w_f"], packed["w_b"], packed["vec"])

    offs = np.concatenate([[0], np.cumsum(branches)]).astype(int)
    return [out[:batch, offs[i]:offs[i] + branches[i]] for i in range(nb)]


# ---------------------------------------------------------------------------- reference ---
def dqn_ab_reference(params, x, s_dim=S_DIM, h_dim=H_DIM, branches=BRANCHES):
    """Pure-JAX reference mirroring the PyTorch forward exactly."""
    if x.ndim == 1:
        x = x.reshape(-1, s_dim)
    x = x.astype(jnp.float32)
    relu = lambda v: jnp.maximum(v, 0.0)
    f = relu(x @ params["w1"] + params["b1"])
    t = relu(f @ params["w2"] + params["b2"])
    s = relu(t @ params["w3"] + params["b3"])
    g, b = params["ln_gamma"], params["ln_beta"]
    outs = []
    for i, br in enumerate(branches):
        d1 = relu(f @ params["wd1"][i] + params["bd1"][i])
        d2 = relu(d1 @ params["wd2"][i] + params["bd2"][i])
        cat = jnp.concatenate([d2, s], axis=1)
        mu = jnp.mean(cat, axis=1, keepdims=True)
        var = jnp.mean((cat - mu) ** 2, axis=1, keepdims=True)
        nrm = (cat - mu) * jax.lax.rsqrt(var + LN_EPS) * g + b
        o1 = relu(nrm @ params["wo1"][i] + params["bo1"][i])
        outs.append(o1 @ params["wo2"][i] + params["bo2"][i])
    return outs


# --------------------------------------------------------------------------------- main ---
if __name__ == "__main__":
    key = jax.random.PRNGKey(0)
    k_param, k_x = jax.random.split(key)

    params = init_params(k_param)
    packed = pack_params(params)                     # one-time host-side packing / LN fold
    x = jax.random.normal(k_x, (4, S_DIM), jnp.float32)   # batch=4, s_dim=10

    outs = dqn_ab_forward(packed, x)
    outs = jax.block_until_ready(outs)

    refs = dqn_ab_reference(params, x)
    for o, r, br in zip(outs, refs, BRANCHES):
        assert o.shape == (4, br), o.shape
        np.testing.assert_allclose(np.asarray(o), np.asarray(r), rtol=2e-4, atol=2e-4)

    print("KERNEL_OK")
</pallas_src>

<mosaic_0001>
module attributes {stable_mosaic.version = 11 : i64} {
  func.func @dqn_ab_kernel(%arg0: i32, %arg1: memref<4x16xf32, #tpu.memory_space<vmem>>, %arg2: memref<80x64xf32, #tpu.memory_space<vmem>>, %arg3: memref<64x512xf32, #tpu.memory_space<vmem>>, %arg4: memref<3x256x128xf32, #tpu.memory_space<vmem>>, %arg5: memref<6x512xf32, #tpu.memory_space<vmem>>, %arg6: memref<4x128xf32, #tpu.memory_space<vmem>>) attributes {dimension_semantics = [#tpu.dimension_semantics<parallel>], iteration_bounds = array<i64: 1>, scalar_prefetch = 0 : i64, scratch_operands = 0 : i64, tpu.core_type = #tpu.core_type<tc>, window_params = [{transform_indices = @transform_0, window_bounds = array<i64: 4, 16>}, {pipeline_mode = #tpu.pipeline_mode<synchronous>, transform_indices = @transform_1, window_bounds = array<i64: 80, 64>}, {pipeline_mode = #tpu.pipeline_mode<synchronous>, transform_indices = @transform_2, window_bounds = array<i64: 64, 512>}, {pipeline_mode = #tpu.pipeline_mode<synchronous>, transform_indices = @transform_3, window_bounds = array<i64: 3, 256, 128>}, {pipeline_mode = #tpu.pipeline_mode<synchronous>, transform_indices = @transform_4, window_bounds = array<i64: 6, 512>}, {transform_indices = @transform_5, window_bounds = array<i64: 4, 128>}]} {
    %c0 = arith.constant 0 : index
    %c0_0 = arith.constant 0 : index
    %0 = vector.load %arg1[%c0, %c0_0] : memref<4x16xf32, #tpu.memory_space<vmem>>, vector<4x16xf32>
    %c0_1 = arith.constant 0 : index
    %c0_2 = arith.constant 0 : index
    %1 = vector.load %arg2[%c0_1, %c0_2] : memref<80x64xf32, #tpu.memory_space<vmem>>, vector<16x64xf32>
    %cst = arith.constant dense<0.000000e+00> : vector<4x64xf32>
    %2 = tpu.matmul %0, %1, %cst {dimension_numbers = #tpu.dot_dimension_numbers<[1], [0], [0], [1], [0, 0, 1, 1], [], []>} : vector<4x16xf32>, vector<16x64xf32>, vector<4x64xf32> -> vector<4x64xf32>
    %c0_3 = arith.constant 0 : index
    %c0_4 = arith.constant 0 : index
    %3 = vector.load %arg5[%c0_3, %c0_4] : memref<6x512xf32, #tpu.memory_space<vmem>>, vector<1x64xf32>
    %4 = vector.broadcast %3 : vector<1x64xf32> to vector<4x64xf32>
    %5 = arith.addf %2, %4 : vector<4x64xf32>
    %cst_5 = arith.constant 0.000000e+00 : f32
    %6 = vector.broadcast %cst_5 : f32 to vector<4x64xf32>
    %7 = arith.maximumf %5, %6 : vector<4x64xf32>
    %c0_6 = arith.constant 0 : index
    %c0_7 = arith.constant 0 : index
    %8 = vector.load %arg3[%c0_6, %c0_7] : memref<64x512xf32, #tpu.memory_space<vmem>>, vector<64x512xf32>
    %cst_8 = arith.constant dense<0.000000e+00> : vector<4x512xf32>
    %9 = tpu.matmul %7, %8, %cst_8 {dimension_numbers = #tpu.dot_dimension_numbers<[1], [0], [0], [1], [0, 0, 1, 1], [], []>} : vector<4x64xf32>, vector<64x512xf32>, vector<4x512xf32> -> vector<4x512xf32>
    %c1 = arith.constant 1 : index
    %c0_9 = arith.constant 0 : index
    %10 = vector.load %arg5[%c1, %c0_9] : memref<6x512xf32, #tpu.memory_space<vmem>>, vector<1x512xf32>
    %11 = vector.broadcast %10 : vector<1x512xf32> to vector<4x512xf32>
    %12 = arith.addf %9, %11 : vector<4x512xf32>
    %cst_10 = arith.constant 0.000000e+00 : f32
    %13 = vector.broadcast %cst_10 : f32 to vector<4x512xf32>
    %14 = arith.maximumf %12, %13 : vector<4x512xf32>
    %15 = vector.extract_strided_slice %14 {offsets = [0, 0], sizes = [4, 64], strides = [1, 1]} : vector<4x512xf32> to vector<4x64xf32>
    %c16 = arith.constant 16 : index
    %c0_11 = arith.constant 0 : index
    %16 = vector.load %arg2[%c16, %c0_11] : memref<80x64xf32, #tpu.memory_space<vmem>>, vector<64x64xf32>
    %cst_12 = arith.constant dense<0.000000e+00> : vector<4x64xf32>
    %17 = tpu.matmul %15, %16, %cst_12 {dimension_numbers = #tpu.dot_dimension_numbers<[1], [0], [0], [1], [0, 0, 1, 1], [], []>} : vector<4x64xf32>, vector<64x64xf32>, vector<4x64xf32> -> vector<4x64xf32>
    %c2 = arith.constant 2 : index
    %c0_13 = arith.constant 0 : index
    %18 = vector.load %arg5[%c2, %c0_13] : memref<6x512xf32, #tpu.memory_space<vmem>>, vector<1x64xf32>
    %19 = vector.broadcast %18 : vector<1x64xf32> to vector<4x64xf32>
    %20 = arith.addf %17, %19 : vector<4x64xf32>
    %cst_14 = arith.constant 0.000000e+00 : f32
    %21 = vector.broadcast %cst_14 : f32 to vector<4x64xf32>
    %22 = arith.maximumf %20, %21 : vector<4x64xf32>
    %cst_15 = arith.constant dense<0.000000e+00> : vector<4xf32>
    %23 = vector.multi_reduction <add>, %22, %cst_15 [1] : vector<4x64xf32> to vector<4xf32>
    %24 = vector.shape_cast %23 : vector<4xf32> to vector<4x1xf32>
    %25 = arith.mulf %22, %22 : vector<4x64xf32>
    %cst_16 = arith.constant dense<0.000000e+00> : vector<4xf32>
    %26 = vector.multi_reduction <add>, %25, %cst_16 [1] : vector<4x64xf32> to vector<4xf32>
    %27 = vector.shape_cast %26 : vector<4xf32> to vector<4x1xf32>
    %c5 = arith.constant 5 : index
    %c0_17 = arith.constant 0 : index
    %28 = vector.load %arg5[%c5, %c0_17] : memref<6x512xf32, #tpu.memory_space<vmem>>, vector<1x128xf32>
    %29 = vector.extract_strided_slice %14 {offsets = [0, 128], sizes = [4, 64], strides = [1, 1]} : vector<4x512xf32> to vector<4x64xf32>
    %c0_18 = arith.constant 0 : index
    %c0_19 = arith.constant 0 : index
    %c0_20 = arith.constant 0 : index
    %30 = vector.load %arg4[%c0_18, %c0_19, %c0_20] : memref<3x256x128xf32, #tpu.memory_space<vmem>>, vector<1x64x64xf32>
    %31 = vector.shape_cast %30 : vector<1x64x64xf32> to vector<64x64xf32>
    %cst_21 = arith.constant dense<0.000000e+00> : vector<4x64xf32>
    %32 = tpu.matmul %29, %31, %cst_21 {dimension_numbers = #tpu.dot_dimension_numbers<[1], [0], [0], [1], [0, 0, 1, 1], [], []>} : vector<4x64xf32>, vector<64x64xf32>, vector<4x64xf32> -> vector<4x64xf32>
    %c3 = arith.constant 3 : index
    %c0_22 = arith.constant 0 : index
    %33 = vector.load %arg5[%c3, %c0_22] : memref<6x512xf32, #tpu.memory_space<vmem>>, vector<1x64xf32>
    %34 = vector.broadcast %33 : vector<1x64xf32> to vector<4x64xf32>
    %35 = arith.addf %32, %34 : vector<4x64xf32>
    %cst_23 = arith.constant 0.000000e+00 : f32
    %36 = vector.broadcast %cst_23 : f32 to vector<4x64xf32>
    %37 = arith.maximumf %35, %36 : vector<4x64xf32>
    %cst_24 = arith.constant dense<0.000000e+00> : vector<4xf32>
    %38 = vector.multi_reduction <add>, %37, %cst_24 [1] : vector<4x64xf32> to vector<4xf32>
    %39 = vector.shape_cast %38 : vector<4xf32> to vector<4x1xf32>
    %40 = arith.mulf %37, %37 : vector<4x64xf32>
    %cst_25 = arith.constant dense<0.000000e+00> : vector<4xf32>
    %41 = vector.multi_reduction <add>, %40, %cst_25 [1] : vector<4x64xf32> to vector<4xf32>
    %42 = vector.shape_cast %41 : vector<4xf32> to vector<4x1xf32>
    %43 = arith.addf %39, %24 : vector<4x1xf32>
    %cst_26 = arith.constant 0.00999999977 : f32
    %44 = vector.broadcast %cst_26 : f32 to vector<4x1xf32>
    %45 = arith.mulf %43, %44 : vector<4x1xf32>
    %46 = arith.addf %42, %27 : vector<4x1xf32>
    %cst_27 = arith.constant 0.00999999977 : f32
    %47 = vector.broadcast %cst_27 : f32 to vector<4x1xf32>
    %48 = arith.mulf %46, %47 : vector<4x1xf32>
    %49 = arith.mulf %45, %45 : vector<4x1xf32>
    %50 = arith.subf %48, %49 : vector<4x1xf32>
    %cst_28 = arith.constant 0.000000e+00 : f32
    %51 = vector.broadcast %cst_28 : f32 to vector<4x1xf32>
    %52 = arith.maximumf %50, %51 : vector<4x1xf32>
    %cst_29 = arith.constant 9.99999974E-6 : f32
    %53 = vector.broadcast %cst_29 : f32 to vector<4x1xf32>
    %54 = arith.addf %52, %53 : vector<4x1xf32>
    %55 = math.rsqrt %54 : vector<4x1xf32>
    %56 = vector.broadcast %45 : vector<4x1xf32> to vector<4x64xf32>
    %57 = arith.subf %37, %56 : vector<4x64xf32>
    %58 = vector.broadcast %55 : vector<4x1xf32> to vector<4x64xf32>
    %59 = arith.mulf %57, %58 : vector<4x64xf32>
    %60 = vector.broadcast %45 : vector<4x1xf32> to vector<4x64xf32>
    %61 = arith.subf %22, %60 : vector<4x64xf32>
    %62 = vector.broadcast %55 : vector<4x1xf32> to vector<4x64xf32>
    %63 = arith.mulf %61, %62 : vector<4x64xf32>
    %c0_30 = arith.constant 0 : index
    %c64 = arith.constant 64 : index
    %c0_31 = arith.constant 0 : index
    %64 = vector.load %arg4[%c0_30, %c64, %c0_31] : memref<3x256x128xf32, #tpu.memory_space<vmem>>, vector<1x64x64xf32>
    %65 = vector.shape_cast %64 : vector<1x64x64xf32> to vector<64x64xf32>
    %cst_32 = arith.constant dense<0.000000e+00> : vector<4x64xf32>
    %66 = tpu.matmul %59, %65, %cst_32 {dimension_numbers = #tpu.dot_dimension_numbers<[1], [0], [0], [1], [0, 0, 1, 1], [], []>} : vector<4x64xf32>, vector<64x64xf32>, vector<4x64xf32> -> vector<4x64xf32>
    %c0_33 = arith.constant 0 : index
    %c128 = arith.constant 128 : index
    %c0_34 = arith.constant 0 : index
    %67 = vector.load %arg4[%c0_33, %c128, %c0_34] : memref<3x256x128xf32, #tpu.memory_space<vmem>>, vector<1x64x64xf32>
    %68 = vector.shape_cast %67 : vector<1x64x64xf32> to vector<64x64xf32>
    %cst_35 = arith.constant dense<0.000000e+00> : vector<4x64xf32>
    %69 = tpu.matmul %63, %68, %cst_35 {dimension_numbers = #tpu.dot_dimension_numbers<[1], [0], [0], [1], [0, 0, 1, 1], [], []>} : vector<4x64xf32>, vector<64x64xf32>, vector<4x64xf32> -> vector<4x64xf32>
    %70 = arith.addf %66, %69 : vector<4x64xf32>
    %c4 = arith.constant 4 : index
    %c0_36 = arith.constant 0 : index
    %71 = vector.load %arg5[%c4, %c0_36] : memref<6x512xf32, #tpu.memory_space<vmem>>, vector<1x64xf32>
    %72 = vector.broadcast %71 : vector<1x64xf32> to vector<4x64xf32>
    %73 = arith.addf %70, %72 : vector<4x64xf32>
    %cst_37 = arith.constant 0.000000e+00 : f32
    %74 = vector.broadcast %cst_37 : f32 to vector<4x64xf32>
    %75 = arith.maximumf %73, %74 : vector<4x64xf32>
    %c0_38 = arith.constant 0 : index
    %c192 = arith.constant 192 : index
    %c0_39 = arith.constant 0 : index
    %76 = vector.load %arg4[%c0_38, %c192, %c0_39] : memref<3x256x128xf32, #tpu.memory_space<vmem>>, vector<1x64x128xf32>
    %77 = vector.shape_cast %76 : vector<1x64x128xf32> to vector<64x128xf32>
    %cst_40 = arith.constant dense<0.000000e+00> : vector<4x128xf32>
    %78 = tpu.matmul %75, %77, %cst_40 {dimension_numbers = #tpu.dot_dimension_numbers<[1], [0], [0], [1], [0, 0, 1, 1], [], []>} : vector<4x64xf32>, vector<64x128xf32>, vector<4x128xf32> -> vector<4x128xf32>
    %79 = vector.broadcast %28 : vector<1x128xf32> to vector<4x128xf32>
    %80 = arith.addf %79, %78 : vector<4x128xf32>
    %81 = vector.extract_strided_slice %14 {offsets = [0, 256], sizes = [4, 64], strides = [1, 1]} : vector<4x512xf32> to vector<4x64xf32>
    %c1_41 = arith.constant 1 : index
    %c0_42 = arith.constant 0 : index
    %c0_43 = arith.constant 0 : index
    %82 = vector.load %arg4[%c1_41, %c0_42, %c0_43] : memref<3x256x128xf32, #tpu.memory_space<vmem>>, vector<1x64x64xf32>
    %83 = vector.shape_cast %82 : vector<1x64x64xf32> to vector<64x64xf32>
    %cst_44 = arith.constant dense<0.000000e+00> : vector<4x64xf32>
    %84 = tpu.matmul %81, %83, %cst_44 {dimension_numbers = #tpu.dot_dimension_numbers<[1], [0], [0], [1], [0, 0, 1, 1], [], []>} : vector<4x64xf32>, vector<64x64xf32>, vector<4x64xf32> -> vector<4x64xf32>
    %c3_45 = arith.constant 3 : index
    %c128_46 = arith.constant 128 : index
    %85 = vector.load %arg5[%c3_45, %c128_46] : memref<6x512xf32, #tpu.memory_space<vmem>>, vector<1x64xf32>
    %86 = vector.broadcast %85 : vector<1x64xf32> to vector<4x64xf32>
    %87 = arith.addf %84, %86 : vector<4x64xf32>
    %cst_47 = arith.constant 0.000000e+00 : f32
    %88 = vector.broadcast %cst_47 : f32 to vector<4x64xf32>
    %89 = arith.maximumf %87, %88 : vector<4x64xf32>
    %cst_48 = arith.constant dense<0.000000e+00> : vector<4xf32>
    %90 = vector.multi_reduction <add>, %89, %cst_48 [1] : vector<4x64xf32> to vector<4xf32>
    %91 = vector.shape_cast %90 : vector<4xf32> to vector<4x1xf32>
    %92 = arith.mulf %89, %89 : vector<4x64xf32>
    %cst_49 = arith.constant dense<0.000000e+00> : vector<4xf32>
    %93 = vector.multi_reduction <add>, %92, %cst_49 [1] : vector<4x64xf32> to vector<4xf32>
    %94 = vector.shape_cast %93 : vector<4xf32> to vector<4x1xf32>
    %95 = arith.addf %91, %24 : vector<4x1xf32>
    %cst_50 = arith.constant 0.00999999977 : f32
    %96 = vector.broadcast %cst_50 : f32 to vector<4x1xf32>
    %97 = arith.mulf %95, %96 : vector<4x1xf32>
    %98 = arith.addf %94, %27 : vector<4x1xf32>
    %cst_51 = arith.constant 0.00999999977 : f32
    %99 = vector.broadcast %cst_51 : f32 to vector<4x1xf32>
    %100 = arith.mulf %98, %99 : vector<4x1xf32>
    %101 = arith.mulf %97, %97 : vector<4x1xf32>
    %102 = arith.subf %100, %101 : vector<4x1xf32>
    %cst_52 = arith.constant 0.000000e+00 : f32
    %103 = vector.broadcast %cst_52 : f32 to vector<4x1xf32>
    %104 = arith.maximumf %102, %103 : vector<4x1xf32>
    %cst_53 = arith.constant 9.99999974E-6 : f32
    %105 = vector.broadcast %cst_53 : f32 to vector<4x1xf32>
    %106 = arith.addf %104, %105 : vector<4x1xf32>
    %107 = math.rsqrt %106 : vector<4x1xf32>
    %108 = vector.broadcast %97 : vector<4x1xf32> to vector<4x64xf32>
    %109 = arith.subf %89, %108 : vector<4x64xf32>
    %110 = vector.broadcast %107 : vector<4x1xf32> to vector<4x64xf32>
    %111 = arith.mulf %109, %110 : vector<4x64xf32>
    %112 = vector.broadcast %97 : vector<4x1xf32> to vector<4x64xf32>
    %113 = arith.subf %22, %112 : vector<4x64xf32>
    %114 = vector.broadcast %107 : vector<4x1xf32> to vector<4x64xf32>
    %115 = arith.mulf %113, %114 : vector<4x64xf32>
    %c1_54 = arith.constant 1 : index
    %c64_55 = arith.constant 64 : index
    %c0_56 = arith.constant 0 : index
    %116 = vector.load %arg4[%c1_54, %c64_55, %c0_56] : memref<3x256x128xf32, #tpu.memory_space<vmem>>, vector<1x64x64xf32>
    %117 = vector.shape_cast %116 : vector<1x64x64xf32> to vector<64x64xf32>
    %cst_57 = arith.constant dense<0.000000e+00> : vector<4x64xf32>
    %118 = tpu.matmul %111, %117, %cst_57 {dimension_numbers = #tpu.dot_dimension_numbers<[1], [0], [0], [1], [0, 0, 1, 1], [], []>} : vector<4x64xf32>, vector<64x64xf32>, vector<4x64xf32> -> vector<4x64xf32>
    %c1_58 = arith.constant 1 : index
    %c128_59 = arith.constant 128 : index
    %c0_60 = arith.constant 0 : index
    %119 = vector.load %arg4[%c1_58, %c128_59, %c0_60] : memref<3x256x128xf32, #tpu.memory_space<vmem>>, vector<1x64x64xf32>
    %120 = vector.shape_cast %119 : vector<1x64x64xf32> to vector<64x64xf32>
    %cst_61 = arith.constant dense<0.000000e+00> : vector<4x64xf32>
    %121 = tpu.matmul %115, %120, %cst_61 {dimension_numbers = #tpu.dot_dimension_numbers<[1], [0], [0], [1], [0, 0, 1, 1], [], []>} : vector<4x64xf32>, vector<64x64xf32>, vector<4x64xf32> -> vector<4x64xf32>
    %122 = arith.addf %118, %121 : vector<4x64xf32>
    %c4_62 = arith.constant 4 : index
    %c128_63 = arith.constant 128 : index
    %123 = vector.load %arg5[%c4_62, %c128_63] : memref<6x512xf32, #tpu.memory_space<vmem>>, vector<1x64xf32>
    %124 = vector.broadcast %123 : vector<1x64xf32> to vector<4x64xf32>
    %125 = arith.addf %122, %124 : vector<4x64xf32>
    %cst_64 = arith.constant 0.000000e+00 : f32
    %126 = vector.broadcast %cst_64 : f32 to vector<4x64xf32>
    %127 = arith.maximumf %125, %126 : vector<4x64xf32>
    %c1_65 = arith.constant 1 : index
    %c192_66 = arith.constant 192 : index
    %c0_67 = arith.constant 0 : index
    %128 = vector.load %arg4[%c1_65, %c192_66, %c0_67] : memref<3x256x128xf32, #tpu.memory_space<vmem>>, vector<1x64x128xf32>
    %129 = vector.shape_cast %128 : vector<1x64x128xf32> to vector<64x128xf32>
    %cst_68 = arith.constant dense<0.000000e+00> : vector<4x128xf32>
    %130 = tpu.matmul %127, %129, %cst_68 {dimension_numbers = #tpu.dot_dimension_numbers<[1], [0], [0], [1], [0, 0, 1, 1], [], []>} : vector<4x64xf32>, vector<64x128xf32>, vector<4x128xf32> -> vector<4x128xf32>
    %131 = arith.addf %80, %130 : vector<4x128xf32>
    %132 = vector.extract_strided_slice %14 {offsets = [0, 384], sizes = [4, 64], strides = [1, 1]} : vector<4x512xf32> to vector<4x64xf32>
    %c2_69 = arith.constant 2 : index
    %c0_70 = arith.constant 0 : index
    %c0_71 = arith.constant 0 : index
    %133 = vector.load %arg4[%c2_69, %c0_70, %c0_71] : memref<3x256x128xf32, #tpu.memory_space<vmem>>, vector<1x64x64xf32>
    %134 = vector.shape_cast %133 : vector<1x64x64xf32> to vector<64x64xf32>
    %cst_72 = arith.constant dense<0.000000e+00> : vector<4x64xf32>
    %135 = tpu.matmul %132, %134, %cst_72 {dimension_numbers = #tpu.dot_dimension_numbers<[1], [0], [0], [1], [0, 0, 1, 1], [], []>} : vector<4x64xf32>, vector<64x64xf32>, vector<4x64xf32> -> vector<4x64xf32>
    %c3_73 = arith.constant 3 : index
    %c256 = arith.constant 256 : index
    %136 = vector.load %arg5[%c3_73, %c256] : memref<6x512xf32, #tpu.memory_space<vmem>>, vector<1x64xf32>
    %137 = vector.broadcast %136 : vector<1x64xf32> to vector<4x64xf32>
    %138 = arith.addf %135, %137 : vector<4x64xf32>
    %cst_74 = arith.constant 0.000000e+00 : f32
    %139 = vector.broadcast %cst_74 : f32 to vector<4x64xf32>
    %140 = arith.maximumf %138, %139 : vector<4x64xf32>
    %cst_75 = arith.constant dense<0.000000e+00> : vector<4xf32>
    %141 = vector.multi_reduction <add>, %140, %cst_75 [1] : vector<4x64xf32> to vector<4xf32>
    %142 = vector.shape_cast %141 : vector<4xf32> to vector<4x1xf32>
    %143 = arith.mulf %140, %140 : vector<4x64xf32>
    %cst_76 = arith.constant dense<0.000000e+00> : vector<4xf32>
    %144 = vector.multi_reduction <add>, %143, %cst_76 [1] : vector<4x64xf32> to vector<4xf32>
    %145 = vector.shape_cast %144 : vector<4xf32> to vector<4x1xf32>
    %146 = arith.addf %142, %24 : vector<4x1xf32>
    %cst_77 = arith.constant 0.00999999977 : f32
    %147 = vector.broadcast %cst_77 : f32 to vector<4x1xf32>
    %148 = arith.mulf %146, %147 : vector<4x1xf32>
    %149 = arith.addf %145, %27 : vector<4x1xf32>
    %cst_78 = arith.constant 0.00999999977 : f32
    %150 = vector.broadcast %cst_78 : f32 to vector<4x1xf32>
    %151 = arith.mulf %149, %150 : vector<4x1xf32>
    %152 = arith.mulf %148, %148 : vector<4x1xf32>
    %153 = arith.subf %151, %152 : vector<4x1xf32>
    %cst_79 = arith.constant 0.000000e+00 : f32
    %154 = vector.broadcast %cst_79 : f32 to vector<4x1xf32>
    %155 = arith.maximumf %153, %154 : vector<4x1xf32>
    %cst_80 = arith.constant 9.99999974E-6 : f32
    %156 = vector.broadcast %cst_80 : f32 to vector<4x1xf32>
    %157 = arith.addf %155, %156 : vector<4x1xf32>
    %158 = math.rsqrt %157 : vector<4x1xf32>
    %159 = vector.broadcast %148 : vector<4x1xf32> to vector<4x64xf32>
    %160 = arith.subf %140, %159 : vector<4x64xf32>
    %161 = vector.broadcast %158 : vector<4x1xf32> to vector<4x64xf32>
    %162 = arith.mulf %160, %161 : vector<4x64xf32>
    %163 = vector.broadcast %148 : vector<4x1xf32> to vector<4x64xf32>
    %164 = arith.subf %22, %163 : vector<4x64xf32>
    %165 = vector.broadcast %158 : vector<4x1xf32> to vector<4x64xf32>
    %166 = arith.mulf %164, %165 : vector<4x64xf32>
    %c2_81 = arith.constant 2 : index
    %c64_82 = arith.constant 64 : index
    %c0_83 = arith.constant 0 : index
    %167 = vector.load %arg4[%c2_81, %c64_82, %c0_83] : memref<3x256x128xf32, #tpu.memory_space<vmem>>, vector<1x64x64xf32>
    %168 = vector.shape_cast %167 : vector<1x64x64xf32> to vector<64x64xf32>
    %cst_84 = arith.constant dense<0.000000e+00> : vector<4x64xf32>
    %169 = tpu.matmul %162, %168, %cst_84 {dimension_numbers = #tpu.dot_dimension_numbers<[1], [0], [0], [1], [0, 0, 1, 1], [], []>} : vector<4x64xf32>, vector<64x64xf32>, vector<4x64xf32> -> vector<4x64xf32>
    %c2_85 = arith.constant 2 : index
    %c128_86 = arith.constant 128 : index
    %c0_87 = arith.constant 0 : index
    %170 = vector.load %arg4[%c2_85, %c128_86, %c0_87] : memref<3x256x128xf32, #tpu.memory_space<vmem>>, vector<1x64x64xf32>
    %171 = vector.shape_cast %170 : vector<1x64x64xf32> to vector<64x64xf32>
    %cst_88 = arith.constant dense<0.000000e+00> : vector<4x64xf32>
    %172 = tpu.matmul %166, %171, %cst_88 {dimension_numbers = #tpu.dot_dimension_numbers<[1], [0], [0], [1], [0, 0, 1, 1], [], []>} : vector<4x64xf32>, vector<64x64xf32>, vector<4x64xf32> -> vector<4x64xf32>
    %173 = arith.addf %169, %172 : vector<4x64xf32>
    %c4_89 = arith.constant 4 : index
    %c256_90 = arith.constant 256 : index
    %174 = vector.load %arg5[%c4_89, %c256_90] : memref<6x512xf32, #tpu.memory_space<vmem>>, vector<1x64xf32>
    %175 = vector.broadcast %174 : vector<1x64xf32> to vector<4x64xf32>
    %176 = arith.addf %173, %175 : vector<4x64xf32>
    %cst_91 = arith.constant 0.000000e+00 : f32
    %177 = vector.broadcast %cst_91 : f32 to vector<4x64xf32>
    %178 = arith.maximumf %176, %177 : vector<4x64xf32>
    %c2_92 = arith.constant 2 : index
    %c192_93 = arith.constant 192 : index
    %c0_94 = arith.constant 0 : index
    %179 = vector.load %arg4[%c2_92, %c192_93, %c0_94] : memref<3x256x128xf32, #tpu.memory_space<vmem>>, vector<1x64x128xf32>
    %180 = vector.shape_cast %179 : vector<1x64x128xf32> to vector<64x128xf32>
    %cst_95 = arith.constant dense<0.000000e+00> : vector<4x128xf32>
    %181 = tpu.matmul %178, %180, %cst_95 {dimension_numbers = #tpu.dot_dimension_numbers<[1], [0], [0], [1], [0, 0, 1, 1], [], []>} : vector<4x64xf32>, vector<64x128xf32>, vector<4x128xf32> -> vector<4x128xf32>
    %182 = arith.addf %131, %181 : vector<4x128xf32>
    %c0_96 = arith.constant 0 : index
    %c0_97 = arith.constant 0 : index
    %183 = vector.load %arg6[%c0_96, %c0_97] : memref<4x128xf32, #tpu.memory_space<vmem>>, vector<4x128xf32>
    tpu.vector_store %arg6[%c0_96, %c0_97], %182 {strides = array<i32>} : memref<4x128xf32, #tpu.memory_space<vmem>>, vector<4x128xf32>,
    return
  }
  func.func @transform_0(%arg0: i32) -> (i32, i32) {
    %c0_i32 = arith.constant 0 : i32
    %c0_i32_0 = arith.constant 0 : i32
    return %arg0, %c0_i32 : i32, i32
  }
  func.func @transform_1(%arg0: i32) -> (i32, i32) {
    %c0_i32 = arith.constant 0 : i32
    %c0_i32_0 = arith.constant 0 : i32
    %c0_i32_1 = arith.constant 0 : i32
    return %c0_i32, %c0_i32_0 : i32, i32
  }
  func.func @transform_2(%arg0: i32) -> (i32, i32) {
    %c0_i32 = arith.constant 0 : i32
    %c0_i32_0 = arith.constant 0 : i32
    %c0_i32_1 = arith.constant 0 : i32
    return %c0_i32, %c0_i32_0 : i32, i32
  }
  func.func @transform_3(%arg0: i32) -> (i32, i32, i32) {
    %c0_i32 = arith.constant 0 : i32
    %c0_i32_0 = arith.constant 0 : i32
    %c0_i32_1 = arith.constant 0 : i32
    %c0_i32_2 = arith.constant 0 : i32
    return %c0_i32, %c0_i32_0, %c0_i32_1 : i32, i32, i32
  }
  func.func @transform_4(%arg0: i32) -> (i32, i32) {
    %c0_i32 = arith.constant 0 : i32
    %c0_i32_0 = arith.constant 0 : i32
    %c0_i32_1 = arith.constant 0 : i32
    return %c0_i32, %c0_i32_0 : i32, i32
  }
  func.func @transform_5(%arg0: i32) -> (i32, i32) {
    %c0_i32 = arith.constant 0 : i32
    %c0_i32_0 = arith.constant 0 : i32
    return %arg0, %c0_i32 : i32, i32
  }
}

</mosaic_0001>

<llo_original>
// kernel: tpu_custom_call.1
$region0: #{tpu_custom_call.1}
  #allocation0 [shape = 'u32[]', space=smem, size = 0x4, offset = 0x4, fixed_abs, tag = 'smem constant byte address 0x4 - core index']
  #allocation1 [shape = 'u32[72,128]{1,0:T(1,128)}', space=vmem, size = 0x9000, scoped, tag = 'internal scratch']
  %s0 = inlined_call_operand.vmem [shape: f32[4,16], index: 0, kind: input, shape index: {}]
  %s1 = inlined_call_operand.vmem [shape: f32[80,64], index: 1, kind: input, shape index: {}]
  %s2 = inlined_call_operand.hbm [shape: f32[64,512], index: 2, kind: input, shape index: {}]
  %s3 = inlined_call_operand.hbm [shape: f32[3,256,128], index: 3, kind: input, shape index: {}]
  %s4 = inlined_call_operand.vmem [shape: f32[6,512], index: 4, kind: input, shape index: {}]
  %s5 = inlined_call_operand.hbm [shape: f32[4,128], index: 5, kind: output, shape index: {}]
  %s6 = sld [smem:[#allocation0]]
  $region38: #{tpu_custom_call.1} parent=0
    _
  %s8 = ssub.s32 1, %s6
  %s9 = scalar_select 0, %s8, %s6
  $region1: #{tpu_custom_call.1} parent=0
    #allocation2 [shape = 'u8[131072]{0}', space=vmem, size = 0x20000, scoped, tag = 'input window, operand 2, single buffered']
    #allocation3 [shape = 's32[1]{0}', space=sflag, size = 0x4, scoped, tag = 'scoped memory for tpu_custom_call.1']
    #allocation4 [shape = 's32[1]{0}', space=sflag, size = 0x4, scoped, tag = 'scoped memory for tpu_custom_call.1']
    #allocation5 [shape = 'u8[393216]{0}', space=vmem, size = 0x60000, scoped, tag = 'input window, operand 3, single buffered']
    #allocation6 [shape = 's32[1]{0}', space=sflag, size = 0x4, scoped, tag = 'scoped memory for tpu_custom_call.1']
    #allocation7 [shape = 'u8[2048]{0}', space=vmem, size = 0x800, scoped, tag = 'output window, operand 0, single buffered']
    %10 = vsyncpa [#allocation3], 0
    %11 = vsyncpa [#allocation6], 0
    %12 = vsyncpa [#allocation4], 0
    // Predicated region
    $region2: #{tpu_custom_call.1} parent=1 // pred_check
      _
    $region3: #{tpu_custom_call.1} parent=1 // pred_check_branch
      %14 = sbr.rel (0) target = $region5
    $region4: #{tpu_custom_call.1} parent=1 // pred_region
      _
    $region5: #{tpu_custom_call.1} parent=1 // pred_fallthru
      _
    // Predicated region
    $region6: #{tpu_custom_call.1} parent=1 // pred_check
      _
    $region7: #{tpu_custom_call.1} parent=1 // pred_check_branch
      %16 = sbr.rel (0) target = $region9
    $region8: #{tpu_custom_call.1} parent=1 // pred_region
      _
    $region9: #{tpu_custom_call.1} parent=1 // pred_fallthru
      _
    // Predicated region
    $region10: #{tpu_custom_call.1} parent=1 // pred_check
      _
    $region11: #{tpu_custom_call.1} parent=1 // pred_check_branch
      %18 = sbr.rel (0) target = $region13
    $region12: #{tpu_custom_call.1} parent=1 // pred_region
      %20 = vsyncadd [#allocation3], 0
      %s21 = sshll.u32 %s2, 4
      %s22 = int_to_ptr.hbm [resolvable:$true] %s21
      %s23 = sshll.u32 [#allocation2], 4
      %s24 = int_to_ptr.vmem [resolvable:$true] %s23
      %29 = dma.hbm_to_vmem [thread:$0]  %s22, 4096, %s24, [#allocation3], 512, 512, 32
    $region13: #{tpu_custom_call.1} parent=1 // pred_fallthru
      _
    // Predicated region
    $region14: #{tpu_custom_call.1} parent=1 // pred_check
      _
    $region15: #{tpu_custom_call.1} parent=1 // pred_check_branch
      %31 = sbr.rel (0) target = $region17
    $region16: #{tpu_custom_call.1} parent=1 // pred_region
      %33 = vsyncadd [#allocation6], 0
      %s34 = sshll.u32 %s3, 4
      %s35 = int_to_ptr.hbm [resolvable:$true] %s34
      %s36 = sshll.u32 [#allocation5], 4
      %s37 = int_to_ptr.vmem [resolvable:$true] %s36
      %42 = dma.hbm_to_vmem [thread:$0]  %s35, 12288, %s37, [#allocation6], 128, 128, 8
    $region17: #{tpu_custom_call.1} parent=1 // pred_fallthru
      _
    // Predicated region
    $region18: #{tpu_custom_call.1} parent=1 // pred_check
      _
    $region19: #{tpu_custom_call.1} parent=1 // pred_check_branch
      %44 = sbr.rel (0) target = $region21
    $region20: #{tpu_custom_call.1} parent=1 // pred_region
      _
    $region21: #{tpu_custom_call.1} parent=1 // pred_fallthru
      _
    // Predicated region
    $region22: #{tpu_custom_call.1} parent=1 // pred_check
      _
    $region23: #{tpu_custom_call.1} parent=1 // pred_check_branch
      %46 = sbr.rel (0) target = $region25
    $region24: #{tpu_custom_call.1} parent=1 // pred_region
      %48 = dma.done [#allocation3], 4096
    $region25: #{tpu_custom_call.1} parent=1 // pred_fallthru
      _
    // Predicated region
    $region26: #{tpu_custom_call.1} parent=1 // pred_check
      _
    $region27: #{tpu_custom_call.1} parent=1 // pred_check_branch
      %50 = sbr.rel (0) target = $region29
    $region28: #{tpu_custom_call.1} parent=1 // pred_region
      %52 = dma.done [#allocation6], 12288
    $region29: #{tpu_custom_call.1} parent=1 // pred_fallthru
      _
    %v53 = vld [vmem:[%s0] sm:$0xf]
    %v54 = vld [vmem:[%s1] sm:$0xff]
    %v55 = vld [vmem:[%s1 + $0x8] sm:$0xff]
    %v56 = vld [vmem:[%s4] ss:$0 sm:$0xff]
    %vm57 = vcmask 130048
    %v59 = vsel %vm57, %v53, 0
    %61 = vmatpush.msra.mxu0 0.0
    %62 = vmatpush.msra.mxu0 0.0
    %63 = vmatpush.msra.mxu0 0.0
    %64 = vmatpush.msra.mxu0 0.0
    %65 = vmatpush.msra.mxu0 0.0
    %66 = vmatpush.msra.mxu0 0.0
    %67 = vmatpush.msra.mxu0 0.0
    %68 = vmatpush.msra.mxu0 0.0
    %69 = vmatpush.msra.mxu0 0.0
    %70 = vmatpush.msra.mxu0 0.0
    %71 = vmatpush.msra.mxu0 0.0
    %72 = vmatpush.msra.mxu0 0.0
    %73 = vmatpush.msra.mxu0 0.0
    %74 = vmatpush.msra.mxu0 0.0
    %75 = vmatpush.msra.mxu0 %v55
    %76 = vmatpush.msra.mxu0 %v54
    %77 = vmatmul.f32.gmra.mxu0 %v59
    %v78 = vpop.f32.mrf.mxu0
    %v79 = vadd.f32 %v56, %v78
    %80 = vdwg.mxu0
    %v81 = vmax.f32 %v79, 0.0
    %v82 = vld [vmem:[#allocation2] sm:$0xff]
    %v83 = vld [vmem:[#allocation2 + $0x8] sm:$0xff]
    %v84 = vld [vmem:[#allocation2 + $0x10] sm:$0xff]
    %v85 = vld [vmem:[#allocation2 + $0x18] sm:$0xff]
    %v86 = vld [vmem:[#allocation2 + $0x20] sm:$0xff]
    %v87 = vld [vmem:[#allocation2 + $0x28] sm:$0xff]
    %v88 = vld [vmem:[#allocation2 + $0x30] sm:$0xff]
    %v89 = vld [vmem:[#allocation2 + $0x38] sm:$0xff]
    %v90 = vld [vmem:[#allocation2 + $0x40] sm:$0xff]
    %v91 = vld [vmem:[#allocation2 + $0x48] sm:$0xff]
    %v92 = vld [vmem:[#allocation2 + $0x50] sm:$0xff]
    %v93 = vld [vmem:[#allocation2 + $0x58] sm:$0xff]
    %v94 = vld [vmem:[#allocation2 + $0x60] sm:$0xff]
    %v95 = vld [vmem:[#allocation2 + $0x68] sm:$0xff]
    %v96 = vld [vmem:[#allocation2 + $0x70] sm:$0xff]
    %v97 = vld [vmem:[#allocation2 + $0x78] sm:$0xff]
    %v98 = vld [vmem:[#allocation2 + $0x80] sm:$0xff]
    %v99 = vld [vmem:[#allocation2 + $0x88] sm:$0xff]
    %v100 = vld [vmem:[#allocation2 + $0x90] sm:$0xff]
    %v101 = vld [vmem:[#allocation2 + $0x98] sm:$0xff]
    %v102 = vld [vmem:[#allocation2 + $0xa0] sm:$0xff]
    %v103 = vld [vmem:[#allocation2 + $0xa8] sm:$0xff]
    %v104 = vld [vmem:[#allocation2 + $0xb0] sm:$0xff]
    %v105 = vld [vmem:[#allocation2 + $0xb8] sm:$0xff]
    %v106 = vld [vmem:[#allocation2 + $0xc0] sm:$0xff]
    %v107 = vld [vmem:[#allocation2 + $0xc8] sm:$0xff]
    %v108 = vld [vmem:[#allocation2 + $0xd0] sm:$0xff]
    %v109 = vld [vmem:[#allocation2 + $0xd8] sm:$0xff]
    %v110 = vld [vmem:[#allocation2 + $0xe0] sm:$0xff]
    %v111 = vld [vmem:[#allocation2 + $0xe8] sm:$0xff]
    %v112 = vld [vmem:[#allocation2 + $0xf0] sm:$0xff]
    %v113 = vld [vmem:[#allocation2 + $0xf8] sm:$0xff]
    %s114 = scalar_lea.vmem %s4, 1
    %v115 = vld [vmem:[%s114] ss:$8 sm:$0xf]
    %v117 = vperm.slane %v115, 0
    %v118 = vperm.slane %v115, 1
    %v119 = vperm.slane %v115, 2
    %v120 = vperm.slane %v115, 3
    %vm125 = vcmask 523264
    %v127 = vsel %vm125, %v81, 0
    %129 = vmatpush.msra.mxu0 0.0
    %130 = vmatpush.msra.mxu0 0.0
    %131 = vmatpush.msra.mxu0 0.0
    %132 = vmatpush.msra.mxu0 0.0
    %133 = vmatpush.msra.mxu0 0.0
    %134 = vmatpush.msra.mxu0 0.0
    %135 = vmatpush.msra.mxu0 0.0
    %136 = vmatpush.msra.mxu0 0.0
    %137 = vmatpush.msra.mxu0 %v110
    %138 = vmatpush.msra.mxu0 %v106
    %139 = vmatpush.msra.mxu0 %v102
    %140 = vmatpush.msra.mxu0 %v98
    %141 = vmatpush.msra.mxu0 %v94
    %142 = vmatpush.msra.mxu0 %v90
    %143 = vmatpush.msra.mxu0 %v86
    %144 = vmatpush.msra.mxu0 %v82
    %145 = vmatmul.f32.gmra.mxu0 %v127
    %v146 = vpop.f32.mrf.mxu0
    %v147 = vadd.f32 %v117, %v146
    %148 = vdwg.mxu0
    %149 = vmatpush.msra.mxu0 0.0
    %150 = vmatpush.msra.mxu0 0.0
    %151 = vmatpush.msra.mxu0 0.0
    %152 = vmatpush.msra.mxu0 0.0
    %153 = vmatpush.msra.mxu0 0.0
    %154 = vmatpush.msra.mxu0 0.0
    %155 = vmatpush.msra.mxu0 0.0
    %156 = vmatpush.msra.mxu0 0.0
    %157 = vmatpush.msra.mxu0 %v111
    %158 = vmatpush.msra.mxu0 %v107
    %159 = vmatpush.msra.mxu0 %v103
    %160 = vmatpush.msra.mxu0 %v99
    %161 = vmatpush.msra.mxu0 %v95
    %162 = vmatpush.msra.mxu0 %v91
    %163 = vmatpush.msra.mxu0 %v87
    %164 = vmatpush.msra.mxu0 %v83
    %165 = vmatmul.f32.gmra.mxu0 %v127
    %v166 = vpop.f32.mrf.mxu0
    %v167 = vadd.f32 %v118, %v166
    %168 = vdwg.mxu0
    %169 = vmatpush.msra.mxu0 0.0
    %170 = vmatpush.msra.mxu0 0.0
    %171 = vmatpush.msra.mxu0 0.0
    %172 = vmatpush.msra.mxu0 0.0
    %173 = vmatpush.msra.mxu0 0.0
    %174 = vmatpush.msra.mxu0 0.0
    %175 = vmatpush.msra.mxu0 0.0
    %176 = vmatpush.msra.mxu0 0.0
    %177 = vmatpush.msra.mxu0 %v112
    %178 = vmatpush.msra.mxu0 %v108
    %179 = vmatpush.msra.mxu0 %v104
    %180 = vmatpush.msra.mxu0 %v100
    %181 = vmatpush.msra.mxu0 %v96
    %182 = vmatpush.msra.mxu0 %v92
    %183 = vmatpush.msra.mxu0 %v88
    %184 = vmatpush.msra.mxu0 %v84
    %185 = vmatmul.f32.gmra.mxu0 %v127
    %v186 = vpop.f32.mrf.mxu0
    %v187 = vadd.f32 %v119, %v186
    %188 = vdwg.mxu0
    %189 = vmatpush.msra.mxu0 0.0
    %190 = vmatpush.msra.mxu0 0.0
    %191 = vmatpush.msra.mxu0 0.0
    %192 = vmatpush.msra.mxu0 0.0
    %193 = vmatpush.msra.mxu0 0.0
    %194 = vmatpush.msra.mxu0 0.0
    %195 = vmatpush.msra.mxu0 0.0
    %196 = vmatpush.msra.mxu0 0.0
    %197 = vmatpush.msra.mxu0 %v113
    %198 = vmatpush.msra.mxu0 %v109
    %199 = vmatpush.msra.mxu0 %v105
    %200 = vmatpush.msra.mxu0 %v101
    %201 = vmatpush.msra.mxu0 %v97
    %202 = vmatpush.msra.mxu0 %v93
    %203 = vmatpush.msra.mxu0 %v89
    %204 = vmatpush.msra.mxu0 %v85
    %205 = vmatmul.f32.gmra.mxu0 %v127
    %v206 = vpop.f32.mrf.mxu0
    %v207 = vadd.f32 %v120, %v206
    %208 = vdwg.mxu0
    %v209 = vmax.f32 %v147, 0.0
    %v210 = vmax.f32 %v167, 0.0
    %v211 = vmax.f32 %v187, 0.0
    %v212 = vmax.f32 %v207, 0.0
    %v213 = vld [vmem:[%s1 + $0x10] sm:$0xff]
    %v214 = vld [vmem:[%s1 + $0x18] sm:$0xff]
    %v215 = vld [vmem:[%s1 + $0x20] sm:$0xff]
    %v216 = vld [vmem:[%s1 + $0x28] sm:$0xff]
    %v217 = vld [vmem:[%s1 + $0x30] sm:$0xff]
    %v218 = vld [vmem:[%s1 + $0x38] sm:$0xff]
    %v219 = vld [vmem:[%s1 + $0x40] sm:$0xff]
    %v220 = vld [vmem:[%s1 + $0x48] sm:$0xff]
    %v221 = vld [vmem:[%s4 + $0x2] ss:$0 sm:$0xff]
    %v223 = vsel %vm125, %v209, 0
    %225 = vmatpush.msra.mxu0 0.0
    %226 = vmatpush.msra.mxu0 0.0
    %227 = vmatpush.msra.mxu0 0.0
    %228 = vmatpush.msra.mxu0 0.0
    %229 = vmatpush.msra.mxu0 0.0
    %230 = vmatpush.msra.mxu0 0.0
    %231 = vmatpush.msra.mxu0 0.0
    %232 = vmatpush.msra.mxu0 0.0
    %233 = vmatpush.msra.mxu0 %v220
    %234 = vmatpush.msra.mxu0 %v219
    %235 = vmatpush.msra.mxu0 %v218
    %236 = vmatpush.msra.mxu0 %v217
    %237 = vmatpush.msra.mxu0 %v216
    %238 = vmatpush.msra.mxu0 %v215
    %239 = vmatpush.msra.mxu0 %v214
    %240 = vmatpush.msra.mxu0 %v213
    %241 = vmatmul.f32.gmra.mxu0 %v223
    %v242 = vpop.f32.mrf.mxu0
    %v243 = vadd.f32 %v221, %v242
    %244 = vdwg.mxu0
    %v245 = vmax.f32 %v243, 0.0
    %vm246 = vcmask 519168
    %v247 = vsel %vm246, %v245, 0.0
    %248 = vadd.xlane.f32.xlu0 %v247
    %v249 = vpop.xlane.xlu0 %248
    %v250 = vmul.f32 %v245, %v245
    %v251 = vsel %vm246, %v250, 0.0
    %252 = vadd.xlane.f32.xlu0 %v251
    %v253 = vpop.xlane.xlu0 %252
    %v254 = vld [vmem:[%s4 + $0x5] ss:$0 sm:$0xff]
    %v255 = vld [vmem:[#allocation5] sm:$0xff]
    %v256 = vld [vmem:[#allocation5 + $0x8] sm:$0xff]
    %v257 = vld [vmem:[#allocation5 + $0x10] sm:$0xff]
    %v258 = vld [vmem:[#allocation5 + $0x18] sm:$0xff]
    %v259 = vld [vmem:[#allocation5 + $0x20] sm:$0xff]
    %v260 = vld [vmem:[#allocation5 + $0x28] sm:$0xff]
    %v261 = vld [vmem:[#allocation5 + $0x30] sm:$0xff]
    %v262 = vld [vmem:[#allocation5 + $0x38] sm:$0xff]
    %v263 = vld [vmem:[%s4 + $0x3] ss:$0 sm:$0xff]
    %v265 = vsel %vm125, %v210, 0
    %267 = vmatpush.msra.mxu0 0.0
    %268 = vmatpush.msra.mxu0 0.0
    %269 = vmatpush.msra.mxu0 0.0
    %270 = vmatpush.msra.mxu0 0.0
    %271 = vmatpush.msra.mxu0 0.0
    %272 = vmatpush.msra.mxu0 0.0
    %273 = vmatpush.msra.mxu0 0.0
    %274 = vmatpush.msra.mxu0 0.0
    %275 = vmatpush.msra.mxu0 %v262
    %276 = vmatpush.msra.mxu0 %v261
    %277 = vmatpush.msra.mxu0 %v260
    %278 = vmatpush.msra.mxu0 %v259
    %279 = vmatpush.msra.mxu0 %v258
    %280 = vmatpush.msra.mxu0 %v257
    %281 = vmatpush.msra.mxu0 %v256
    %282 = vmatpush.msra.mxu0 %v255
    %283 = vmatmul.f32.gmra.mxu0 %v265
    %v284 = vpop.f32.mrf.mxu0
    %v285 = vadd.f32 %v263, %v284
    %286 = vdwg.mxu0
    %v287 = vmax.f32 %v285, 0.0
    %v288 = vsel %vm246, %v287, 0.0
    %289 = vadd.xlane.f32.xlu0 %v288
    %v290 = vpop.xlane.xlu0 %289
    %v291 = vmul.f32 %v287, %v287
    %v292 = vsel %vm246, %v291, 0.0
    %293 = vadd.xlane.f32.xlu0 %v292
    %v294 = vpop.xlane.xlu0 %293
    %v295 = vadd.f32 %v290, %v249
    %v296 = vmul.f32 %v295, 0.01
    %v297 = vadd.f32 %v294, %v253
    %v298 = vmul.f32 %v297, 0.01
    %v299 = vmul.f32 %v296, %v296
    %v300 = vsub.f32 %v298, %v299
    %v301 = vmax.f32 %v300, 0.0
    %v302 = vadd.f32 %v301, 1e-05
    %v303 = vrsqrt.pop %v302
    %v304 = vmul.f32 %v303, %v302
    %v305 = vmul.f32 %v304, %v303
    %v306 = vmul.f32 0.5, %v305
    %v307 = vsub.f32 1.5, %v306
    %v308 = vmul.f32 %v303, %v307
    %vm309 = vweird.f32 %v302
    %vm310 = vweird.f32 %v303
    %vm311 = vmor %vm309, %vm310
    %v312 = vsel %vm311, %v303, %v308
    %v313 = vsub.f32 %v287, %v296
    %v314 = vmul.f32 %v313, %v312
    %v315 = vsub.f32 %v245, %v296
    %v316 = vmul.f32 %v315, %v312
    %v317 = vld [vmem:[#allocation5 + $0x40] sm:$0xff]
    %v318 = vld [vmem:[#allocation5 + $0x48] sm:$0xff]
    %v319 = vld [vmem:[#allocation5 + $0x50] sm:$0xff]
    %v320 = vld [vmem:[#allocation5 + $0x58] sm:$0xff]
    %v321 = vld [vmem:[#allocation5 + $0x60] sm:$0xff]
    %v322 = vld [vmem:[#allocation5 + $0x68] sm:$0xff]
    %v323 = vld [vmem:[#allocation5 + $0x70] sm:$0xff]
    %v324 = vld [vmem:[#allocation5 + $0x78] sm:$0xff]
    %v325 = vld [vmem:[#allocation5 + $0x80] sm:$0xff]
    %v326 = vld [vmem:[#allocation5 + $0x88] sm:$0xff]
    %v327 = vld [vmem:[#allocation5 + $0x90] sm:$0xff]
    %v328 = vld [vmem:[#allocation5 + $0x98] sm:$0xff]
    %v329 = vld [vmem:[#allocation5 + $0xa0] sm:$0xff]
    %v330 = vld [vmem:[#allocation5 + $0xa8] sm:$0xff]
    %v331 = vld [vmem:[#allocation5 + $0xb0] sm:$0xff]
    %v332 = vld [vmem:[#allocation5 + $0xb8] sm:$0xff]
    %v334 = vsel %vm125, %v316, 0
    %336 = vmatpush.msra.mxu0 0.0
    %337 = vmatpush.msra.mxu0 0.0
    %338 = vmatpush.msra.mxu0 0.0
    %339 = vmatpush.msra.mxu0 0.0
    %340 = vmatpush.msra.mxu0 0.0
    %341 = vmatpush.msra.mxu0 0.0
    %342 = vmatpush.msra.mxu0 0.0
    %343 = vmatpush.msra.mxu0 0.0
    %344 = vmatpush.msra.mxu0 %v332
    %345 = vmatpush.msra.mxu0 %v331
    %346 = vmatpush.msra.mxu0 %v330
    %347 = vmatpush.msra.mxu0 %v329
    %348 = vmatpush.msra.mxu0 %v328
    %349 = vmatpush.msra.mxu0 %v327
    %350 = vmatpush.msra.mxu0 %v326
    %351 = vmatpush.msra.mxu0 %v325
    %352 = vmatmul.f32.gmra.mxu0 %v334
    %v353 = vpop.f32.mrf.mxu0
    %v354 = vadd.f32 0.0, %v353
    %355 = vdwg.mxu0
    %v357 = vsel %vm125, %v314, 0
    %359 = vmatpush.msra.mxu0 0.0
    %360 = vmatpush.msra.mxu0 0.0
    %361 = vmatpush.msra.mxu0 0.0
    %362 = vmatpush.msra.mxu0 0.0
    %363 = vmatpush.msra.mxu0 0.0
    %364 = vmatpush.msra.mxu0 0.0
    %365 = vmatpush.msra.mxu0 0.0
    %366 = vmatpush.msra.mxu0 0.0
    %367 = vmatpush.msra.mxu0 %v324
    %368 = vmatpush.msra.mxu0 %v323
    %369 = vmatpush.msra.mxu0 %v322
    %370 = vmatpush.msra.mxu0 %v321
    %371 = vmatpush.msra.mxu0 %v320
    %372 = vmatpush.msra.mxu0 %v319
    %373 = vmatpush.msra.mxu0 %v318
    %374 = vmatpush.msra.mxu0 %v317
    %375 = vmatmul.f32.gmra.mxu0 %v357
    %v376 = vpop.f32.mrf.mxu0
    %v377 = vadd.f32 %v354, %v376
    %378 = vdwg.mxu0
    %v379 = vld [vmem:[%s4 + $0x4] ss:$0 sm:$0xff]
    %v380 = vadd.f32 %v377, %v379
    %v381 = vmax.f32 %v380, 0.0
    %v382 = vld [vmem:[#allocation5 + $0xc0] sm:$0xff]
    %v383 = vld [vmem:[#allocation5 + $0xc8] sm:$0xff]
    %v384 = vld [vmem:[#allocation5 + $0xd0] sm:$0xff]
    %v385 = vld [vmem:[#allocation5 + $0xd8] sm:$0xff]
    %v386 = vld [vmem:[#allocation5 + $0xe0] sm:$0xff]
    %v387 = vld [vmem:[#allocation5 + $0xe8] sm:$0xff]
    %v388 = vld [vmem:[#allocation5 + $0xf0] sm:$0xff]
    %v389 = vld [vmem:[#allocation5 + $0xf8] sm:$0xff]
    %v391 = vsel %vm125, %v381, 0
    %393 = vmatpush.msra.mxu0 0.0
    %394 = vmatpush.msra.mxu0 0.0
    %395 = vmatpush.msra.mxu0 0.0
    %396 = vmatpush.msra.mxu0 0.0
    %397 = vmatpush.msra.mxu0 0.0
    %398 = vmatpush.msra.mxu0 0.0
    %399 = vmatpush.msra.mxu0 0.0
    %400 = vmatpush.msra.mxu0 0.0
    %401 = vmatpush.msra.mxu0 %v389
    %402 = vmatpush.msra.mxu0 %v388
    %403 = vmatpush.msra.mxu0 %v387
    %404 = vmatpush.msra.mxu0 %v386
    %405 = vmatpush.msra.mxu0 %v385
    %406 = vmatpush.msra.mxu0 %v384
    %407 = vmatpush.msra.mxu0 %v383
    %408 = vmatpush.msra.mxu0 %v382
    %409 = vmatmul.f32.gmra.mxu0 %v391
    %v410 = vpop.f32.mrf.mxu0
    %v411 = vadd.f32 0.0, %v410
    %412 = vdwg.mxu0
    %v413 = vadd.f32 %v254, %v411
    %s414 = scalar_lea.vmem [#allocation5], 256
    %v415 = vld [vmem:[%s414] sm:$0xff]
    %v416 = vld [vmem:[%s414 + $0x8] sm:$0xff]
    %v417 = vld [vmem:[%s414 + $0x10] sm:$0xff]
    %v418 = vld [vmem:[%s414 + $0x18] sm:$0xff]
    %v419 = vld [vmem:[%s414 + $0x20] sm:$0xff]
    %v420 = vld [vmem:[%s414 + $0x28] sm:$0xff]
    %v421 = vld [vmem:[%s414 + $0x30] sm:$0xff]
    %v422 = vld [vmem:[%s414 + $0x38] sm:$0xff]
    %v423 = vld [vmem:[%s4 + $0xb] ss:$0 sm:$0xff]
    %v425 = vsel %vm125, %v211, 0
    %427 = vmatpush.msra.mxu0 0.0
    %428 = vmatpush.msra.mxu0 0.0
    %429 = vmatpush.msra.mxu0 0.0
    %430 = vmatpush.msra.mxu0 0.0
    %431 = vmatpush.msra.mxu0 0.0
    %432 = vmatpush.msra.mxu0 0.0
    %433 = vmatpush.msra.mxu0 0.0
    %434 = vmatpush.msra.mxu0 0.0
    %435 = vmatpush.msra.mxu0 %v422
    %436 = vmatpush.msra.mxu0 %v421
    %437 = vmatpush.msra.mxu0 %v420
    %438 = vmatpush.msra.mxu0 %v419
    %439 = vmatpush.msra.mxu0 %v418
    %440 = vmatpush.msra.mxu0 %v417
    %441 = vmatpush.msra.mxu0 %v416
    %442 = vmatpush.msra.mxu0 %v415
    %443 = vmatmul.f32.gmra.mxu0 %v425
    %v444 = vpop.f32.mrf.mxu0
    %v445 = vadd.f32 %v423, %v444
    %446 = vdwg.mxu0
    %v447 = vmax.f32 %v445, 0.0
    %v448 = vsel %vm246, %v447, 0.0
    %449 = vadd.xlane.f32.xlu0 %v448
    %v450 = vpop.xlane.xlu0 %449
    %v451 = vmul.f32 %v447, %v447
    %v452 = vsel %vm246, %v451, 0.0
    %453 = vadd.xlane.f32.xlu0 %v452
    %v454 = vpop.xlane.xlu0 %453
    %v455 = vadd.f32 %v450, %v249
    %v456 = vmul.f32 %v455, 0.01
    %v457 = vadd.f32 %v454, %v253
    %v458 = vmul.f32 %v457, 0.01
    %v459 = vmul.f32 %v456, %v456
    %v460 = vsub.f32 %v458, %v459
    %v461 = vmax.f32 %v460, 0.0
    %v462 = vadd.f32 %v461, 1e-05
    %v463 = vrsqrt.pop %v462
    %v464 = vmul.f32 %v463, %v462
    %v465 = vmul.f32 %v464, %v463
    %v466 = vmul.f32 0.5, %v465
    %v467 = vsub.f32 1.5, %v466
    %v468 = vmul.f32 %v463, %v467
    %vm469 = vweird.f32 %v462
    %vm470 = vweird.f32 %v463
    %vm471 = vmor %vm469, %vm470
    %v472 = vsel %vm471, %v463, %v468
    %v473 = vsub.f32 %v447, %v456
    %v474 = vmul.f32 %v473, %v472
    %v475 = vsub.f32 %v245, %v456
    %v476 = vmul.f32 %v475, %v472
    %v477 = vld [vmem:[%s414 + $0x40] sm:$0xff]
    %v478 = vld [vmem:[%s414 + $0x48] sm:$0xff]
    %v479 = vld [vmem:[%s414 + $0x50] sm:$0xff]
    %v480 = vld [vmem:[%s414 + $0x58] sm:$0xff]
    %v481 = vld [vmem:[%s414 + $0x60] sm:$0xff]
    %v482 = vld [vmem:[%s414 + $0x68] sm:$0xff]
    %v483 = vld [vmem:[%s414 + $0x70] sm:$0xff]
    %v484 = vld [vmem:[%s414 + $0x78] sm:$0xff]
    %v485 = vld [vmem:[%s414 + $0x80] sm:$0xff]
    %v486 = vld [vmem:[%s414 + $0x88] sm:$0xff]
    %v487 = vld [vmem:[%s414 + $0x90] sm:$0xff]
    %v488 = vld [vmem:[%s414 + $0x98] sm:$0xff]
    %v489 = vld [vmem:[%s414 + $0xa0] sm:$0xff]
    %v490 = vld [vmem:[%s414 + $0xa8] sm:$0xff]
    %v491 = vld [vmem:[%s414 + $0xb0] sm:$0xff]
    %v492 = vld [vmem:[%s414 + $0xb8] sm:$0xff]
    %v494 = vsel %vm125, %v476, 0
    %496 = vmatpush.msra.mxu0 0.0
    %497 = vmatpush.msra.mxu0 0.0
    %498 = vmatpush.msra.mxu0 0.0
    %499 = vmatpush.msra.mxu0 0.0
    %500 = vmatpush.msra.mxu0 0.0
    %501 = vmatpush.msra.mxu0 0.0
    %502 = vmatpush.msra.mxu0 0.0
    %503 = vmatpush.msra.mxu0 0.0
    %504 = vmatpush.msra.mxu0 %v492
    %505 = vmatpush.msra.mxu0 %v491
    %506 = vmatpush.msra.mxu0 %v490
    %507 = vmatpush.msra.mxu0 %v489
    %508 = vmatpush.msra.mxu0 %v488
    %509 = vmatpush.msra.mxu0 %v487
    %510 = vmatpush.msra.mxu0 %v486
    %511 = vmatpush.msra.mxu0 %v485
    %512 = vmatmul.f32.gmra.mxu0 %v494
    %v513 = vpop.f32.mrf.mxu0
    %v514 = vadd.f32 0.0, %v513
    %515 = vdwg.mxu0
    %v517 = vsel %vm125, %v474, 0
    %519 = vmatpush.msra.mxu0 0.0
    %520 = vmatpush.msra.mxu0 0.0
    %521 = vmatpush.msra.mxu0 0.0
    %522 = vmatpush.msra.mxu0 0.0
    %523 = vmatpush.msra.mxu0 0.0
    %524 = vmatpush.msra.mxu0 0.0
    %525 = vmatpush.msra.mxu0 0.0
    %526 = vmatpush.msra.mxu0 0.0
    %527 = vmatpush.msra.mxu0 %v484
    %528 = vmatpush.msra.mxu0 %v483
    %529 = vmatpush.msra.mxu0 %v482
    %530 = vmatpush.msra.mxu0 %v481
    %531 = vmatpush.msra.mxu0 %v480
    %532 = vmatpush.msra.mxu0 %v479
    %533 = vmatpush.msra.mxu0 %v478
    %534 = vmatpush.msra.mxu0 %v477
    %535 = vmatmul.f32.gmra.mxu0 %v517
    %v536 = vpop.f32.mrf.mxu0
    %v537 = vadd.f32 %v514, %v536
    %538 = vdwg.mxu0
    %v539 = vld [vmem:[%s4 + $0xc] ss:$0 sm:$0xff]
    %v540 = vadd.f32 %v537, %v539
    %v541 = vmax.f32 %v540, 0.0
    %v542 = vld [vmem:[%s414 + $0xc0] sm:$0xff]
    %v543 = vld [vmem:[%s414 + $0xc8] sm:$0xff]
    %v544 = vld [vmem:[%s414 + $0xd0] sm:$0xff]
    %v545 = vld [vmem:[%s414 + $0xd8] sm:$0xff]
    %v546 = vld [vmem:[%s414 + $0xe0] sm:$0xff]
    %v547 = vld [vmem:[%s414 + $0xe8] sm:$0xff]
    %v548 = vld [vmem:[%s414 + $0xf0] sm:$0xff]
    %v549 = vld [vmem:[%s414 + $0xf8] sm:$0xff]
    %v551 = vsel %vm125, %v541, 0
    %553 = vmatpush.msra.mxu0 0.0
    %554 = vmatpush.msra.mxu0 0.0
    %555 = vmatpush.msra.mxu0 0.0
    %556 = vmatpush.msra.mxu0 0.0
    %557 = vmatpush.msra.mxu0 0.0
    %558 = vmatpush.msra.mxu0 0.0
    %559 = vmatpush.msra.mxu0 0.0
    %560 = vmatpush.msra.mxu0 0.0
    %561 = vmatpush.msra.mxu0 %v549
    %562 = vmatpush.msra.mxu0 %v548
    %563 = vmatpush.msra.mxu0 %v547
    %564 = vmatpush.msra.mxu0 %v546
    %565 = vmatpush.msra.mxu0 %v545
    %566 = vmatpush.msra.mxu0 %v544
    %567 = vmatpush.msra.mxu0 %v543
    %568 = vmatpush.msra.mxu0 %v542
    %569 = vmatmul.f32.gmra.mxu0 %v551
    %v570 = vpop.f32.mrf.mxu0
    %v571 = vadd.f32 0.0, %v570
    %572 = vdwg.mxu0
    %v573 = vadd.f32 %v413, %v571
    %s574 = scalar_lea.vmem [#allocation5], 512
    %v575 = vld [vmem:[%s574] sm:$0xff]
    %v576 = vld [vmem:[%s574 + $0x8] sm:$0xff]
    %v577 = vld [vmem:[%s574 + $0x10] sm:$0xff]
    %v578 = vld [vmem:[%s574 + $0x18] sm:$0xff]
    %v579 = vld [vmem:[%s574 + $0x20] sm:$0xff]
    %v580 = vld [vmem:[%s574 + $0x28] sm:$0xff]
    %v581 = vld [vmem:[%s574 + $0x30] sm:$0xff]
    %v582 = vld [vmem:[%s574 + $0x38] sm:$0xff]
    %v583 = vld [vmem:[%s4 + $0x13] ss:$0 sm:$0xff]
    %v585 = vsel %vm125, %v212, 0
    %587 = vmatpush.msra.mxu0 0.0
    %588 = vmatpush.msra.mxu0 0.0
    %589 = vmatpush.msra.mxu0 0.0
    %590 = vmatpush.msra.mxu0 0.0
    %591 = vmatpush.msra.mxu0 0.0
    %592 = vmatpush.msra.mxu0 0.0
    %593 = vmatpush.msra.mxu0 0.0
    %594 = vmatpush.msra.mxu0 0.0
    %595 = vmatpush.msra.mxu0 %v582
    %596 = vmatpush.msra.mxu0 %v581
    %597 = vmatpush.msra.mxu0 %v580
    %598 = vmatpush.msra.mxu0 %v579
    %599 = vmatpush.msra.mxu0 %v578
    %600 = vmatpush.msra.mxu0 %v577
    %601 = vmatpush.msra.mxu0 %v576
    %602 = vmatpush.msra.mxu0 %v575
    %603 = vmatmul.f32.gmra.mxu0 %v585
    %v604 = vpop.f32.mrf.mxu0
    %v605 = vadd.f32 %v583, %v604
    %606 = vdwg.mxu0
    %v607 = vmax.f32 %v605, 0.0
    %v608 = vsel %vm246, %v607, 0.0
    %609 = vadd.xlane.f32.xlu0 %v608
    %v610 = vpop.xlane.xlu0 %609
    %v611 = vmul.f32 %v607, %v607
    %v612 = vsel %vm246, %v611, 0.0
    %613 = vadd.xlane.f32.xlu0 %v612
    %v614 = vpop.xlane.xlu0 %613
    %v615 = vadd.f32 %v610, %v249
    %v616 = vmul.f32 %v615, 0.01
    %v617 = vadd.f32 %v614, %v253
    %v618 = vmul.f32 %v617, 0.01
    %v619 = vmul.f32 %v616, %v616
    %v620 = vsub.f32 %v618, %v619
    %v621 = vmax.f32 %v620, 0.0
    %v622 = vadd.f32 %v621, 1e-05
    %v623 = vrsqrt.pop %v622
    %v624 = vmul.f32 %v623, %v622
    %v625 = vmul.f32 %v624, %v623
    %v626 = vmul.f32 0.5, %v625
    %v627 = vsub.f32 1.5, %v626
    %v628 = vmul.f32 %v623, %v627
    %vm629 = vweird.f32 %v622
    %vm630 = vweird.f32 %v623
    %vm631 = vmor %vm629, %vm630
    %v632 = vsel %vm631, %v623, %v628
    %v633 = vsub.f32 %v607, %v616
    %v634 = vmul.f32 %v633, %v632
    %v635 = vsub.f32 %v245, %v616
    %v636 = vmul.f32 %v635, %v632
    %v637 = vld [vmem:[%s574 + $0x40] sm:$0xff]
    %v638 = vld [vmem:[%s574 + $0x48] sm:$0xff]
    %v639 = vld [vmem:[%s574 + $0x50] sm:$0xff]
    %v640 = vld [vmem:[%s574 + $0x58] sm:$0xff]
    %v641 = vld [vmem:[%s574 + $0x60] sm:$0xff]
    %v642 = vld [vmem:[%s574 + $0x68] sm:$0xff]
    %v643 = vld [vmem:[%s574 + $0x70] sm:$0xff]
    %v644 = vld [vmem:[%s574 + $0x78] sm:$0xff]
    %v645 = vld [vmem:[%s574 + $0x80] sm:$0xff]
    %v646 = vld [vmem:[%s574 + $0x88] sm:$0xff]
    %v647 = vld [vmem:[%s574 + $0x90] sm:$0xff]
    %v648 = vld [vmem:[%s574 + $0x98] sm:$0xff]
    %v649 = vld [vmem:[%s574 + $0xa0] sm:$0xff]
    %v650 = vld [vmem:[%s574 + $0xa8] sm:$0xff]
    %v651 = vld [vmem:[%s574 + $0xb0] sm:$0xff]
    %v652 = vld [vmem:[%s574 + $0xb8] sm:$0xff]
    %v654 = vsel %vm125, %v636, 0
    %656 = vmatpush.msra.mxu0 0.0
    %657 = vmatpush.msra.mxu0 0.0
    %658 = vmatpush.msra.mxu0 0.0
    %659 = vmatpush.msra.mxu0 0.0
    %660 = vmatpush.msra.mxu0 0.0
    %661 = vmatpush.msra.mxu0 0.0
    %662 = vmatpush.msra.mxu0 0.0
    %663 = vmatpush.msra.mxu0 0.0
    %664 = vmatpush.msra.mxu0 %v652
    %665 = vmatpush.msra.mxu0 %v651
    %666 = vmatpush.msra.mxu0 %v650
    %667 = vmatpush.msra.mxu0 %v649
    %668 = vmatpush.msra.mxu0 %v648
    %669 = vmatpush.msra.mxu0 %v647
    %670 = vmatpush.msra.mxu0 %v646
    %671 = vmatpush.msra.mxu0 %v645
    %672 = vmatmul.f32.gmra.mxu0 %v654
    %v673 = vpop.f32.mrf.mxu0
    %v674 = vadd.f32 0.0, %v673
    %675 = vdwg.mxu0
    %v677 = vsel %vm125, %v634, 0
    %679 = vmatpush.msra.mxu0 0.0
    %680 = vmatpush.msra.mxu0 0.0
    %681 = vmatpush.msra.mxu0 0.0
    %682 = vmatpush.msra.mxu0 0.0
    %683 = vmatpush.msra.mxu0 0.0
    %684 = vmatpush.msra.mxu0 0.0
    %685 = vmatpush.msra.mxu0 0.0
    %686 = vmatpush.msra.mxu0 0.0
    %687 = vmatpush.msra.mxu0 %v644
    %688 = vmatpush.msra.mxu0 %v643
    %689 = vmatpush.msra.mxu0 %v642
    %690 = vmatpush.msra.mxu0 %v641
    %691 = vmatpush.msra.mxu0 %v640
    %692 = vmatpush.msra.mxu0 %v639
    %693 = vmatpush.msra.mxu0 %v638
    %694 = vmatpush.msra.mxu0 %v637
    %695 = vmatmul.f32.gmra.mxu0 %v677
    %v696 = vpop.f32.mrf.mxu0
    %v697 = vadd.f32 %v674, %v696
    %698 = vdwg.mxu0
    %v699 = vld [vmem:[%s4 + $0x14] ss:$0 sm:$0xff]
    %v700 = vadd.f32 %v697, %v699
    %v701 = vmax.f32 %v700, 0.0
    %v702 = vld [vmem:[%s574 + $0xc0] sm:$0xff]
    %v703 = vld [vmem:[%s574 + $0xc8] sm:$0xff]
    %v704 = vld [vmem:[%s574 + $0xd0] sm:$0xff]
    %v705 = vld [vmem:[%s574 + $0xd8] sm:$0xff]
    %v706 = vld [vmem:[%s574 + $0xe0] sm:$0xff]
    %v707 = vld [vmem:[%s574 + $0xe8] sm:$0xff]
    %v708 = vld [vmem:[%s574 + $0xf0] sm:$0xff]
    %v709 = vld [vmem:[%s574 + $0xf8] sm:$0xff]
    %v711 = vsel %vm125, %v701, 0
    %713 = vmatpush.msra.mxu0 0.0
    %714 = vmatpush.msra.mxu0 0.0
    %715 = vmatpush.msra.mxu0 0.0
    %716 = vmatpush.msra.mxu0 0.0
    %717 = vmatpush.msra.mxu0 0.0
    %718 = vmatpush.msra.mxu0 0.0
    %719 = vmatpush.msra.mxu0 0.0
    %720 = vmatpush.msra.mxu0 0.0
    %721 = vmatpush.msra.mxu0 %v709
    %722 = vmatpush.msra.mxu0 %v708
    %723 = vmatpush.msra.mxu0 %v707
    %724 = vmatpush.msra.mxu0 %v706
    %725 = vmatpush.msra.mxu0 %v705
    %726 = vmatpush.msra.mxu0 %v704
    %727 = vmatpush.msra.mxu0 %v703
    %728 = vmatpush.msra.mxu0 %v702
    %729 = vmatmul.f32.gmra.mxu0 %v711
    %v730 = vpop.f32.mrf.mxu0
    %v731 = vadd.f32 0.0, %v730
    %732 = vdwg.mxu0
    %v733 = vadd.f32 %v573, %v731
    %734 = vst [vmem:[#allocation7] sm:$0xf] %v733
    // Predicated region
    $region30: #{tpu_custom_call.1} parent=1 // pred_check
      _
    $region31: #{tpu_custom_call.1} parent=1 // pred_check_branch
      %736 = sbr.rel (0) target = $region33
    $region32: #{tpu_custom_call.1} parent=1 // pred_region
      %738 = vsyncadd [#allocation4], 0
      %s740 = sshll.u32 [#allocation7], 4
      %s741 = int_to_ptr.vmem [resolvable:$true] %s740
      %s742 = sshll.u32 %s5, 4
      %s743 = int_to_ptr.hbm [resolvable:$true] %s742
      %745 = dma.vmem_to_hbm [thread:$0]  %s741, 64, %s743, [#allocation4]
    $region33: #{tpu_custom_call.1} parent=1 // pred_fallthru
      _
    // Predicated region
    $region34: #{tpu_custom_call.1} parent=1 // pred_check
      _
    $region35: #{tpu_custom_call.1} parent=1 // pred_check_branch
      %747 = sbr.rel (0) target = $region37
    $region36: #{tpu_custom_call.1} parent=1 // pred_region
      %749 = dma.done [#allocation4], 64
    $region37: #{tpu_custom_call.1} parent=1 // pred_fallthru
      _
    %750 = vsyncpa [#allocation3], 1
    %751 = vsyncpa [#allocation6], 1
    %752 = vsyncpa [#allocation4], 1

</llo_original>
